<compile_context>
chip_gen: v5e
topology: v5e:2x2
jax: 0.10.0
libtpu: 0.0.40
codegen_flags: <defaults>
</compile_context>

<pallas_src>
import jax
import jax.numpy as jnp
from jax import lax
from jax.experimental import pallas as pl
from jax.experimental.pallas import tpu as pltpu


def _round_up(x, m):
    return ((x + m - 1) // m) * m


def _judge_kernel(x_ref, w1_ref, b1_ref, w2_ref, b2_ref, o_ref):
    # x_ref : (TILE, F)  float32  -- natural row-major tile of flattened inputs
    # w1_ref: (H, F)     float32  -- fc1 weight (PyTorch layout, no transpose)
    # b1_ref: (H, 1)     float32
    # w2_ref: (O, H)     float32  -- fc2 weight
    # b2_ref: (O, 1)     float32
    # o_ref : (O, TILE)  float32  -- lane-dense output tile (out^T)
    #
    # hT = W1 @ x^T : contract last dim of W1 with last dim of x -> (H, TILE).
    hT = lax.dot_general(
        w1_ref[...], x_ref[...],
        dimension_numbers=(((1,), (1,)), ((), ())),
        preferred_element_type=jnp.float32,
    )
    hT = jnp.maximum(hT + b1_ref[...], 0.0)                      # ReLU
    outT = jnp.dot(w2_ref[...], hT, preferred_element_type=jnp.float32)
    o_ref[...] = (outT + b2_ref[...]).astype(o_ref.dtype)


def judge_forward(X, w1, b1, w2, b2, *, block_cols=8192):
    """Equivalent of JudgeModel.forward.

    X : float array of shape (B, num_notes, num_dim) (any trailing shape; it is
        flattened per row, exactly like X.view(len(X), -1))
    w1: (hidden, num_notes*num_dim), b1: (hidden,)     -- fc1
    w2: (output, hidden),            b2: (output,)     -- fc2
    returns float32 array of shape (B, output)
    """
    B = X.shape[0]
    x_flat = X.reshape(B, -1).astype(jnp.float32)                # (B, F)
    F_in = x_flat.shape[1]
    H = w1.shape[0]
    O = w2.shape[0]
    assert w1.shape == (H, F_in) and b1.shape == (H,)
    assert w2.shape == (O, H) and b2.shape == (O,)

    # ---- tile sizing -------------------------------------------------------
    # Batch rides the lane axis of the output tile, so the tile must be a
    # multiple of 128.  Large tiles amortize the fixed per-grid-step overhead;
    # the cap keeps >= 2 grid steps for big batches so both v7x TensorCores
    # get work via the "parallel" dimension semantics.
    tile = max(128, _round_up(min(block_cols, B), 128))
    b_pad128 = _round_up(B, 128)
    two_step_cap = max(128, _round_up(pl.cdiv(b_pad128, 2), 128))
    tile = min(tile, two_step_cap)
    B_pad = _round_up(B, tile)

    if B_pad != B:
        # Zero rows never reach the caller (sliced off below).  Callers with
        # large batches should use a batch that is a multiple of the tile to
        # skip this copy entirely.
        x_flat = jnp.pad(x_flat, ((0, B_pad - B), (0, 0)))

    w1f = w1.astype(jnp.float32)
    w2f = w2.astype(jnp.float32)
    b1c = b1.reshape(H, 1).astype(jnp.float32)
    b2c = b2.reshape(O, 1).astype(jnp.float32)

    grid = (B_pad // tile,)

    cost = pl.CostEstimate(
        flops=2 * B_pad * (F_in * H + H * O),
        transcendentals=0,
        bytes_accessed=4 * (B_pad * F_in + H * F_in + H + O * H + O + B_pad * O),
    )

    out_T = pl.pallas_call(
        _judge_kernel,
        out_shape=jax.ShapeDtypeStruct((O, B_pad), jnp.float32),
        grid_spec=pltpu.PrefetchScalarGridSpec(
            num_scalar_prefetch=0,
            grid=grid,
            in_specs=[
                pl.BlockSpec((tile, F_in), lambda i: (i, 0)),    # x row tile
                pl.BlockSpec((H, F_in), lambda i: (0, 0)),       # fc1 weight
                pl.BlockSpec((H, 1), lambda i: (0, 0)),          # fc1 bias
                pl.BlockSpec((O, H), lambda i: (0, 0)),          # fc2 weight
                pl.BlockSpec((O, 1), lambda i: (0, 0)),          # fc2 bias
            ],
            out_specs=pl.BlockSpec((O, tile), lambda i: (0, i)),  # lane-dense
        ),
        compiler_params=pltpu.CompilerParams(
            dimension_semantics=("parallel",),
        ),
        cost_estimate=cost,
    )(x_flat, w1f, b1c, w2f, b2c)

    return out_T[:, :B].T                                        # (B, O)


if __name__ == "__main__":
    key = jax.random.PRNGKey(0)
    k_x, k_w1, k_b1, k_w2, k_b2 = jax.random.split(key, 5)

    # Shapes implied by the module: three note suggestions, a few dims each.
    num_notes, num_dim = 3, 5          # input_dim = (3, 5)  -> 15 features
    hidden_dim = 32
    output_dim = 3
    batch = 8

    F_in = num_notes * num_dim

    # Deterministic "weights" (kaiming_normal_ ~ scaled normal; exact init
    # scheme is irrelevant for the forward-pass semantics being tested).
    w1 = jax.random.normal(k_w1, (hidden_dim, F_in), dtype=jnp.float32) * (2.0 / F_in) ** 0.5
    b1 = jax.random.normal(k_b1, (hidden_dim,), dtype=jnp.float32) * 0.1
    w2 = jax.random.normal(k_w2, (output_dim, hidden_dim), dtype=jnp.float32) * (2.0 / hidden_dim) ** 0.5
    b2 = jax.random.normal(k_b2, (output_dim,), dtype=jnp.float32) * 0.1

    X = jax.random.normal(k_x, (batch, num_notes, num_dim), dtype=jnp.float32)

    out = judge_forward(X, w1, b1, w2, b2)
    out = jax.block_until_ready(out)

    # Plain-JAX reference: relu(x @ W1^T + b1) @ W2^T + b2
    x_flat = X.reshape(batch, -1)
    ref = jnp.maximum(x_flat @ w1.T + b1, 0.0) @ w2.T + b2

    assert out.shape == (batch, output_dim)
    assert jnp.allclose(out, ref, atol=1e-4, rtol=1e-4), "mismatch vs reference MLP"

    print("KERNEL_OK")
</pallas_src>

<mosaic_0001>
module attributes {stable_mosaic.version = 11 : i64} {
  func.func @_judge_kernel(%arg0: i32, %arg1: memref<128x15xf32, #tpu.memory_space<vmem>>, %arg2: memref<32x15xf32, #tpu.memory_space<vmem>>, %arg3: memref<32x1xf32, #tpu.memory_space<vmem>>, %arg4: memref<3x32xf32, #tpu.memory_space<vmem>>, %arg5: memref<3x1xf32, #tpu.memory_space<vmem>>, %arg6: memref<3x128xf32, #tpu.memory_space<vmem>>) attributes {dimension_semantics = [#tpu.dimension_semantics<parallel>], iteration_bounds = array<i64: 1>, scalar_prefetch = 0 : i64, scratch_operands = 0 : i64, tpu.core_type = #tpu.core_type<tc>, window_params = [{transform_indices = @transform_0, window_bounds = array<i64: 128, 15>}, {pipeline_mode = #tpu.pipeline_mode<synchronous>, transform_indices = @transform_1, window_bounds = array<i64: 32, 15>}, {pipeline_mode = #tpu.pipeline_mode<synchronous>, transform_indices = @transform_2, window_bounds = array<i64: 32, 1>}, {pipeline_mode = #tpu.pipeline_mode<synchronous>, transform_indices = @transform_3, window_bounds = array<i64: 3, 32>}, {pipeline_mode = #tpu.pipeline_mode<synchronous>, transform_indices = @transform_4, window_bounds = array<i64: 3, 1>}, {transform_indices = @transform_5, window_bounds = array<i64: 3, 128>}]} {
    %c0 = arith.constant 0 : index
    %c0_0 = arith.constant 0 : index
    %0 = vector.load %arg2[%c0, %c0_0] : memref<32x15xf32, #tpu.memory_space<vmem>>, vector<32x15xf32>
    %c0_1 = arith.constant 0 : index
    %c0_2 = arith.constant 0 : index
    %1 = vector.load %arg1[%c0_1, %c0_2] : memref<128x15xf32, #tpu.memory_space<vmem>>, vector<128x15xf32>
    %cst = arith.constant dense<0.000000e+00> : vector<32x128xf32>
    %2 = tpu.matmul %0, %1, %cst {dimension_numbers = #tpu.dot_dimension_numbers<[1], [1], [0], [0], [0, 0, 1, 0], [], []>} : vector<32x15xf32>, vector<128x15xf32>, vector<32x128xf32> -> vector<32x128xf32>
    %c0_3 = arith.constant 0 : index
    %c0_4 = arith.constant 0 : index
    %3 = vector.load %arg3[%c0_3, %c0_4] : memref<32x1xf32, #tpu.memory_space<vmem>>, vector<32x1xf32>
    %4 = vector.broadcast %3 : vector<32x1xf32> to vector<32x128xf32>
    %5 = arith.addf %2, %4 : vector<32x128xf32>
    %cst_5 = arith.constant 0.000000e+00 : f32
    %6 = vector.broadcast %cst_5 : f32 to vector<32x128xf32>
    %7 = arith.maximumf %5, %6 : vector<32x128xf32>
    %c0_6 = arith.constant 0 : index
    %c0_7 = arith.constant 0 : index
    %8 = vector.load %arg4[%c0_6, %c0_7] : memref<3x32xf32, #tpu.memory_space<vmem>>, vector<3x32xf32>
    %cst_8 = arith.constant dense<0.000000e+00> : vector<3x128xf32>
    %9 = tpu.matmul %8, %7, %cst_8 {dimension_numbers = #tpu.dot_dimension_numbers<[1], [0], [0], [1], [0, 0, 1, 1], [], []>} : vector<3x32xf32>, vector<32x128xf32>, vector<3x128xf32> -> vector<3x128xf32>
    %c0_9 = arith.constant 0 : index
    %c0_10 = arith.constant 0 : index
    %10 = vector.load %arg5[%c0_9, %c0_10] : memref<3x1xf32, #tpu.memory_space<vmem>>, vector<3x1xf32>
    %11 = vector.broadcast %10 : vector<3x1xf32> to vector<3x128xf32>
    %12 = arith.addf %9, %11 : vector<3x128xf32>
    %c0_11 = arith.constant 0 : index
    %c0_12 = arith.constant 0 : index
    %13 = vector.load %arg6[%c0_11, %c0_12] : memref<3x128xf32, #tpu.memory_space<vmem>>, vector<3x128xf32>
    tpu.vector_store %arg6[%c0_11, %c0_12], %12 {strides = array<i32>} : memref<3x128xf32, #tpu.memory_space<vmem>>, vector<3x128xf32>,
    return
  }
  func.func @transform_0(%arg0: i32) -> (i32, i32) {
    %c0_i32 = arith.constant 0 : i32
    %c0_i32_0 = arith.constant 0 : i32
    return %arg0, %c0_i32 : i32, i32
  }
  func.func @transform_1(%arg0: i32) -> (i32, i32) {
    %c0_i32 = arith.constant 0 : i32
    %c0_i32_0 = arith.constant 0 : i32
    %c0_i32_1 = arith.constant 0 : i32
    return %c0_i32, %c0_i32_0 : i32, i32
  }
  func.func @transform_2(%arg0: i32) -> (i32, i32) {
    %c0_i32 = arith.constant 0 : i32
    %c0_i32_0 = arith.constant 0 : i32
    %c0_i32_1 = arith.constant 0 : i32
    return %c0_i32, %c0_i32_0 : i32, i32
  }
  func.func @transform_3(%arg0: i32) -> (i32, i32) {
    %c0_i32 = arith.constant 0 : i32
    %c0_i32_0 = arith.constant 0 : i32
    %c0_i32_1 = arith.constant 0 : i32
    return %c0_i32, %c0_i32_0 : i32, i32
  }
  func.func @transform_4(%arg0: i32) -> (i32, i32) {
    %c0_i32 = arith.constant 0 : i32
    %c0_i32_0 = arith.constant 0 : i32
    %c0_i32_1 = arith.constant 0 : i32
    return %c0_i32, %c0_i32_0 : i32, i32
  }
  func.func @transform_5(%arg0: i32) -> (i32, i32) {
    %c0_i32 = arith.constant 0 : i32
    %c0_i32_0 = arith.constant 0 : i32
    return %c0_i32, %arg0 : i32, i32
  }
}

</mosaic_0001>

<llo_original>
// kernel: tpu_custom_call.1
$region0: #{tpu_custom_call.1}
  #allocation0 [shape = 'u32[]', space=smem, size = 0x4, offset = 0x4, fixed_abs, tag = 'smem constant byte address 0x4 - core index']
  #allocation1 [shape = 'u32[72,128]{1,0:T(1,128)}', space=vmem, size = 0x9000, scoped, tag = 'internal scratch']
  %s0 = inlined_call_operand.vmem [shape: f32[128,15], index: 0, kind: input, shape index: {}]
  %s1 = inlined_call_operand.vmem [shape: f32[32,15], index: 1, kind: input, shape index: {}]
  %s2 = inlined_call_operand.vmem [shape: f32[32,1], index: 2, kind: input, shape index: {}]
  %s3 = inlined_call_operand.vmem [shape: f32[3,32], index: 3, kind: input, shape index: {}]
  %s4 = inlined_call_operand.vmem [shape: f32[3,1], index: 4, kind: input, shape index: {}]
  %s5 = inlined_call_operand.hbm [shape: f32[3,128], index: 5, kind: output, shape index: {}]
  %s6 = sld [smem:[#allocation0]]
  $region30: #{tpu_custom_call.1} parent=0
    _
  %s8 = ssub.s32 1, %s6
  %s9 = scalar_select 0, %s8, %s6
  $region1: #{tpu_custom_call.1} parent=0
    #allocation2 [shape = 'u8[2048]{0}', space=vmem, size = 0x800, scoped, tag = 'output window, operand 0, single buffered']
    #allocation3 [shape = 's32[1]{0}', space=sflag, size = 0x4, scoped, tag = 'scoped memory for tpu_custom_call.1']
    %10 = vsyncpa [#allocation3], 0
    // Predicated region
    $region2: #{tpu_custom_call.1} parent=1 // pred_check
      _
    $region3: #{tpu_custom_call.1} parent=1 // pred_check_branch
      %12 = sbr.rel (0) target = $region5
    $region4: #{tpu_custom_call.1} parent=1 // pred_region
      _
    $region5: #{tpu_custom_call.1} parent=1 // pred_fallthru
      _
    // Predicated region
    $region6: #{tpu_custom_call.1} parent=1 // pred_check
      _
    $region7: #{tpu_custom_call.1} parent=1 // pred_check_branch
      %14 = sbr.rel (0) target = $region9
    $region8: #{tpu_custom_call.1} parent=1 // pred_region
      _
    $region9: #{tpu_custom_call.1} parent=1 // pred_fallthru
      _
    // Predicated region
    $region10: #{tpu_custom_call.1} parent=1 // pred_check
      _
    $region11: #{tpu_custom_call.1} parent=1 // pred_check_branch
      %16 = sbr.rel (0) target = $region13
    $region12: #{tpu_custom_call.1} parent=1 // pred_region
      _
    $region13: #{tpu_custom_call.1} parent=1 // pred_fallthru
      _
    // Predicated region
    $region14: #{tpu_custom_call.1} parent=1 // pred_check
      _
    $region15: #{tpu_custom_call.1} parent=1 // pred_check_branch
      %18 = sbr.rel (0) target = $region17
    $region16: #{tpu_custom_call.1} parent=1 // pred_region
      _
    $region17: #{tpu_custom_call.1} parent=1 // pred_fallthru
      _
    // Predicated region
    $region18: #{tpu_custom_call.1} parent=1 // pred_check
      _
    $region19: #{tpu_custom_call.1} parent=1 // pred_check_branch
      %20 = sbr.rel (0) target = $region21
    $region20: #{tpu_custom_call.1} parent=1 // pred_region
      _
    $region21: #{tpu_custom_call.1} parent=1 // pred_fallthru
      _
    %v21 = vld [vmem:[%s1] sm:$0xff]
    %v22 = vld [vmem:[%s1 + $0x8] sm:$0xff]
    %v23 = vld [vmem:[%s1 + $0x10] sm:$0xff]
    %v24 = vld [vmem:[%s1 + $0x18] sm:$0xff]
    %v25 = vld [vmem:[%s0] sm:$0xff]
    %v26 = vld [vmem:[%s0 + $0x8] sm:$0xff]
    %v27 = vld [vmem:[%s0 + $0x10] sm:$0xff]
    %v28 = vld [vmem:[%s0 + $0x18] sm:$0xff]
    %v29 = vld [vmem:[%s0 + $0x20] sm:$0xff]
    %v30 = vld [vmem:[%s0 + $0x28] sm:$0xff]
    %v31 = vld [vmem:[%s0 + $0x30] sm:$0xff]
    %v32 = vld [vmem:[%s0 + $0x38] sm:$0xff]
    %v33 = vld [vmem:[%s0 + $0x40] sm:$0xff]
    %v34 = vld [vmem:[%s0 + $0x48] sm:$0xff]
    %v35 = vld [vmem:[%s0 + $0x50] sm:$0xff]
    %v36 = vld [vmem:[%s0 + $0x58] sm:$0xff]
    %v37 = vld [vmem:[%s0 + $0x60] sm:$0xff]
    %v38 = vld [vmem:[%s0 + $0x68] sm:$0xff]
    %v39 = vld [vmem:[%s0 + $0x70] sm:$0xff]
    %v40 = vld [vmem:[%s0 + $0x78] sm:$0xff]
    %v41 = vld [vmem:[%s2] sm:$0xff]
    %v42 = vld [vmem:[%s2 + $0x8] sm:$0xff]
    %v43 = vld [vmem:[%s2 + $0x10] sm:$0xff]
    %v44 = vld [vmem:[%s2 + $0x18] sm:$0xff]
    %46 = vset.pattern.permute.xlu0 0
    %47 = vperm.xlu0 %46, %v41
    %v48 = vpop.permute.xlu0 %47
    %51 = vset.pattern.permute.xlu0 0
    %52 = vperm.xlu0 %51, %v42
    %v53 = vpop.permute.xlu0 %52
    %56 = vset.pattern.permute.xlu0 0
    %57 = vperm.xlu0 %56, %v43
    %v58 = vpop.permute.xlu0 %57
    %61 = vset.pattern.permute.xlu0 0
    %62 = vperm.xlu0 %61, %v44
    %v63 = vpop.permute.xlu0 %62
    %vm65 = vcmask 121856
    %v67 = vsel %vm65, %v21, 0
    %v70 = vsel %vm65, %v22, 0
    %v73 = vsel %vm65, %v23, 0
    %v76 = vsel %vm65, %v24, 0
    %v79 = vsel %vm65, %v25, 0
    %v82 = vsel %vm65, %v26, 0
    %v85 = vsel %vm65, %v27, 0
    %v88 = vsel %vm65, %v28, 0
    %v91 = vsel %vm65, %v29, 0
    %v94 = vsel %vm65, %v30, 0
    %v97 = vsel %vm65, %v31, 0
    %v100 = vsel %vm65, %v32, 0
    %v103 = vsel %vm65, %v33, 0
    %v106 = vsel %vm65, %v34, 0
    %v109 = vsel %vm65, %v35, 0
    %v112 = vsel %vm65, %v36, 0
    %v115 = vsel %vm65, %v37, 0
    %v118 = vsel %vm65, %v38, 0
    %v121 = vsel %vm65, %v39, 0
    %v124 = vsel %vm65, %v40, 0
    %126 = vmatpush.xpose.msra.mxu0 %v124
    %127 = vmatpush.xpose.msra.mxu0 %v121
    %128 = vmatpush.xpose.msra.mxu0 %v118
    %129 = vmatpush.xpose.msra.mxu0 %v115
    %130 = vmatpush.xpose.msra.mxu0 %v112
    %131 = vmatpush.xpose.msra.mxu0 %v109
    %132 = vmatpush.xpose.msra.mxu0 %v106
    %133 = vmatpush.xpose.msra.mxu0 %v103
    %134 = vmatpush.xpose.msra.mxu0 %v100
    %135 = vmatpush.xpose.msra.mxu0 %v97
    %136 = vmatpush.xpose.msra.mxu0 %v94
    %137 = vmatpush.xpose.msra.mxu0 %v91
    %138 = vmatpush.xpose.msra.mxu0 %v88
    %139 = vmatpush.xpose.msra.mxu0 %v85
    %140 = vmatpush.xpose.msra.mxu0 %v82
    %141 = vmatpush.xpose.msra.mxu0 %v79
    %142 = vmatmul.f32.gmra.mxu0 %v67
    %v143 = vpop.f32.mrf.mxu0
    %v144 = vadd.f32 %v48, %v143
    %145 = vmatmul.f32.gmra.mxu0 %v70
    %v146 = vpop.f32.mrf.mxu0
    %v147 = vadd.f32 %v53, %v146
    %148 = vmatmul.f32.gmra.mxu0 %v73
    %v149 = vpop.f32.mrf.mxu0
    %v150 = vadd.f32 %v58, %v149
    %151 = vmatmul.f32.gmra.mxu0 %v76
    %v152 = vpop.f32.mrf.mxu0
    %v153 = vadd.f32 %v63, %v152
    %154 = vdwg.mxu0
    %v155 = vmax.f32 %v144, 0.0
    %v156 = vmax.f32 %v147, 0.0
    %v157 = vmax.f32 %v150, 0.0
    %v158 = vmax.f32 %v153, 0.0
    %v159 = vld [vmem:[%s3] sm:$0x7]
    %v160 = vld [vmem:[%s4] sm:$0x7]
    %162 = vset.pattern.permute.xlu0 0
    %163 = vperm.xlu0 %162, %v160
    %v164 = vpop.permute.xlu0 %163
    %vm166 = vcmask 261120
    %v168 = vsel %vm166, %v159, 0
    %170 = vmatpush.msra.mxu0 0.0
    %171 = vmatpush.msra.mxu0 0.0
    %172 = vmatpush.msra.mxu0 0.0
    %173 = vmatpush.msra.mxu0 0.0
    %174 = vmatpush.msra.mxu0 0.0
    %175 = vmatpush.msra.mxu0 0.0
    %176 = vmatpush.msra.mxu0 0.0
    %177 = vmatpush.msra.mxu0 0.0
    %178 = vmatpush.msra.mxu0 0.0
    %179 = vmatpush.msra.mxu0 0.0
    %180 = vmatpush.msra.mxu0 0.0
    %181 = vmatpush.msra.mxu0 0.0
    %182 = vmatpush.msra.mxu0 %v158
    %183 = vmatpush.msra.mxu0 %v157
    %184 = vmatpush.msra.mxu0 %v156
    %185 = vmatpush.msra.mxu0 %v155
    %186 = vmatmul.f32.gmra.mxu0 %v168
    %v187 = vpop.f32.mrf.mxu0
    %v188 = vadd.f32 %v164, %v187
    %189 = vdwg.mxu0
    %190 = vst [vmem:[#allocation2] sm:$0x7] %v188
    // Predicated region
    $region22: #{tpu_custom_call.1} parent=1 // pred_check
      _
    $region23: #{tpu_custom_call.1} parent=1 // pred_check_branch
      %192 = sbr.rel (0) target = $region25
    $region24: #{tpu_custom_call.1} parent=1 // pred_region
      %194 = vsyncadd [#allocation3], 0
      %s196 = sshll.u32 [#allocation2], 4
      %s197 = int_to_ptr.vmem [resolvable:$true] %s196
      %s198 = sshll.u32 %s5, 4
      %s199 = int_to_ptr.hbm [resolvable:$true] %s198
      %201 = dma.vmem_to_hbm [thread:$0]  %s197, 64, %s199, [#allocation3]
    $region25: #{tpu_custom_call.1} parent=1 // pred_fallthru
      _
    // Predicated region
    $region26: #{tpu_custom_call.1} parent=1 // pred_check
      _
    $region27: #{tpu_custom_call.1} parent=1 // pred_check_branch
      %203 = sbr.rel (0) target = $region29
    $region28: #{tpu_custom_call.1} parent=1 // pred_region
      %205 = dma.done [#allocation3], 64
    $region29: #{tpu_custom_call.1} parent=1 // pred_fallthru
      _
    %206 = vsyncpa [#allocation3], 1

</llo_original>
